<compile_context>
chip_gen: v6e
topology: v6e:2x2x1
jax: 0.10.0
libtpu: 0.0.40
codegen_flags: <defaults>
</compile_context>

<pallas_src>
import jax
import jax.numpy as jnp
from jax.experimental import pallas as pl
from jax.experimental.pallas import tpu as pltpu


def _round_up(n: int, m: int) -> int:
    return ((n + m - 1) // m) * m


# ---------------------------------------------------------------------------
# Kernel: one batch tile -> out = relu(x @ A + gen*g + time*t + c) @ W2 + b2
# ---------------------------------------------------------------------------
def delta_mlp_kernel(x_ref, tg_ref,
                     a_ref, aux_ref,
                     w2_ref, b2_ref,
                     out_ref):
    x = x_ref[...]                                    # [TB, IN]  f32
    gen = tg_ref[:, 0:1]                              # [TB, 1]   f32
    time = tg_ref[:, 1:2]                             # [TB, 1]   f32

    # Collapsed fc -> fc_1 -> fc1 pre-activation (bf16 MXU, f32 accumulate).
    h = jnp.dot(x.astype(jnp.bfloat16), a_ref[...],
                preferred_element_type=jnp.float32)   # [TB, HP]

    # Rank-1 gen/time columns + fused bias in spare VPU slots (f32).
    # aux rows: 0 = g_vec, 1 = t_vec, 2 = c.
    h = h + gen * aux_ref[0:1, :] + time * aux_ref[1:2, :] + aux_ref[2:3, :]
    h = jnp.maximum(h, 0.0)                           # relu

    out = jnp.dot(h.astype(jnp.bfloat16), w2_ref[...],
                  preferred_element_type=jnp.float32) + b2_ref[...]
    out_ref[...] = out.astype(out_ref.dtype)


# ---------------------------------------------------------------------------
# Wrapper
# ---------------------------------------------------------------------------
def delta_mlp(x, time, gen, prep, *, tile_b: int = 512):
    """x: [B, in] f32, time/gen: [B, 1] f32 -> [B, output_size] f32."""
    B, in_size = x.shape
    hp = prep["a"].shape[1]            # padded hidden (multiple of 128)
    op = prep["w2"].shape[1]           # padded output (multiple of 128)
    out_size = prep["out_size"]

    tb = min(tile_b, _round_up(B, 8))  # sublane-aligned batch tile
    bp = _round_up(B, tb)

    tg = jnp.concatenate([gen, time], axis=1).astype(jnp.float32)   # [B, 2]
    xf = x if x.dtype == jnp.float32 else x.astype(jnp.float32)
    if bp != B:                        # pad batch to a whole number of tiles
        xf = jnp.pad(xf, ((0, bp - B), (0, 0)))
        tg = jnp.pad(tg, ((0, bp - B), (0, 0)))

    grid = (bp // tb,)
    row = lambda cols: pl.BlockSpec((tb, cols), lambda i: (i, 0))
    resident = lambda arr: pl.BlockSpec(arr.shape, lambda i: (0, 0))

    flops = 2 * bp * (in_size * hp + hp * op)
    bytes_accessed = (xf.size * 4 + tg.size * 4 + bp * op * 4
                      + prep["a"].size * 2 + prep["w2"].size * 2
                      + (prep["aux"].size + prep["b2"].size) * 4)

    out = pl.pallas_call(
        delta_mlp_kernel,
        out_shape=jax.ShapeDtypeStruct((bp, op), jnp.float32),
        grid_spec=pltpu.PrefetchScalarGridSpec(
            num_scalar_prefetch=0,
            grid=grid,
            in_specs=[row(in_size), row(2),
                      resident(prep["a"]), resident(prep["aux"]),
                      resident(prep["w2"]), resident(prep["b2"])],
            out_specs=pl.BlockSpec((tb, op), lambda i: (i, 0)),
        ),
        compiler_params=pltpu.CompilerParams(
            dimension_semantics=("parallel",)),
        cost_estimate=pl.CostEstimate(flops=flops, transcendentals=0,
                                      bytes_accessed=bytes_accessed),
    )(xf, tg, prep["a"], prep["aux"], prep["w2"], prep["b2"])

    return out[:B, :out_size]


# ---------------------------------------------------------------------------
# Parameters
# ---------------------------------------------------------------------------
def init_params(key, input_size, hidden_size, output_size):
    """Raw params matching the torch module; W stored [in, out], b as [1, out]."""
    ks = jax.random.split(key, 4)

    def lin(k, fan_in, fan_out):
        kw, kb = jax.random.split(k)
        bound = 1.0 / jnp.sqrt(float(fan_in))
        w = jax.random.uniform(kw, (fan_in, fan_out), jnp.float32, -bound, bound)
        b = jax.random.uniform(kb, (1, fan_out), jnp.float32, -bound, bound)
        return w, b

    w_fc, b_fc = lin(ks[0], input_size, 128)        # fc:   Linear(in, 128)
    w1, b1 = lin(ks[1], 129, 256)                   # fc_1: Linear(129, 256)
    wfc1, bfc1 = lin(ks[2], 257, hidden_size)       # fc1:  Linear(257, hidden)
    w2, b2 = lin(ks[3], hidden_size, output_size)   # fc2:  Linear(hidden, out)
    # fc_2 = Linear(257, 256) exists in __init__ but is unused in forward.
    return dict(w_fc=w_fc, b_fc=b_fc, w1=w1, b1=b1,
                wfc1=wfc1, bfc1=bfc1, w2=w2, b2=b2)


def prepare_params(params):
    """Collapse fc->fc_1->fc1, pad lane dims to 128, cast MXU operands to bf16."""
    w_fc, b_fc = params["w_fc"], params["b_fc"]
    w1m, w1g, b1 = params["w1"][:128], params["w1"][128:129], params["b1"]
    wfm, wft, bf = params["wfc1"][:256], params["wfc1"][256:257], params["bfc1"]
    w2, b2 = params["w2"], params["b2"]

    hidden, out_size = w2.shape

    w1m_wfm = w1m @ wfm                               # [128, hidden]
    a = w_fc @ w1m_wfm                                # [in, hidden]
    g_vec = w1g @ wfm                                 # [1, hidden]
    t_vec = wft                                       # [1, hidden]
    c = b_fc @ w1m_wfm + b1 @ wfm + bf                # [1, hidden]

    hp = _round_up(hidden, 128)
    op = _round_up(out_size, 128)
    pad_h = lambda m: jnp.pad(m, ((0, 0), (0, hp - hidden)))
    a, g_vec, t_vec, c = pad_h(a), pad_h(g_vec), pad_h(t_vec), pad_h(c)
    aux = jnp.concatenate([g_vec, t_vec, c], axis=0)  # [3, HP] f32 (VPU path)
    w2p = jnp.pad(w2, ((0, hp - hidden), (0, op - out_size)))
    b2p = jnp.pad(b2, ((0, 0), (0, op - out_size)))

    return dict(a=a.astype(jnp.bfloat16),             # MXU operand (bf16)
                aux=aux,                               # g_vec / t_vec / c (f32)
                w2=w2p.astype(jnp.bfloat16), b2=b2p,
                out_size=out_size)


# ---------------------------------------------------------------------------
# References
# ---------------------------------------------------------------------------
def reference(x, time, gen, params):
    """Pure-JAX f32 reference mirroring the torch forward (explicit concats)."""
    h = x @ params["w_fc"] + params["b_fc"]
    h = jnp.concatenate([h, gen], axis=1)
    h = h @ params["w1"] + params["b1"]
    h = jnp.concatenate([h, time], axis=1)
    h = jnp.maximum(h @ params["wfc1"] + params["bfc1"], 0.0)
    return h @ params["w2"] + params["b2"]


def reference_prepped(x, time, gen, prep):
    """Pure-JAX reference using the same collapsed / padded / bf16 math."""
    h = jnp.dot(x.astype(jnp.bfloat16), prep["a"],
                preferred_element_type=jnp.float32)
    h = h + gen * prep["aux"][0:1] + time * prep["aux"][1:2] + prep["aux"][2:3]
    h = jnp.maximum(h, 0.0)
    out = jnp.dot(h.astype(jnp.bfloat16), prep["w2"],
                  preferred_element_type=jnp.float32) + prep["b2"]
    return out[:, :prep["out_size"]]


if __name__ == "__main__":
    input_size, hidden_size, output_size = 32, 64, 16
    B = 20   # deliberately not tile-aligned -> exercises batch padding

    key = jax.random.PRNGKey(0)
    kx, kt, kg, kp = jax.random.split(key, 4)
    x = jax.random.normal(kx, (B, input_size), jnp.float32)
    time = jax.random.normal(kt, (B, 1), jnp.float32)
    gen = jax.random.normal(kg, (B, 1), jnp.float32)

    params = init_params(kp, input_size, hidden_size, output_size)
    prep = prepare_params(params)

    out = delta_mlp(x, time, gen, prep, tile_b=8)   # 3 grid steps, batch padded 20->24
    out = jax.block_until_ready(out)
    assert out.shape == (B, output_size)

    # Same-precision check (collapsed bf16-MXU math) — near exact.
    ref_bf16 = reference_prepped(x, time, gen, prep)
    assert jnp.allclose(out, ref_bf16, atol=1e-4, rtol=1e-4), "mismatch vs prepped ref"

    # Original-module f32 reference — loose tolerance due to bf16 MXU operands.
    ref_f32 = reference(x, time, gen, params)
    assert jnp.allclose(out, ref_f32, atol=3e-2, rtol=3e-2), "mismatch vs f32 ref"

    print("KERNEL_OK")
</pallas_src>

<mosaic_0001>
module attributes {stable_mosaic.version = 11 : i64} {
  func.func @delta_mlp_kernel(%arg0: i32, %arg1: memref<8x32xf32, #tpu.memory_space<vmem>>, %arg2: memref<8x2xf32, #tpu.memory_space<vmem>>, %arg3: memref<32x128xbf16, #tpu.memory_space<vmem>>, %arg4: memref<3x128xf32, #tpu.memory_space<vmem>>, %arg5: memref<128x128xbf16, #tpu.memory_space<vmem>>, %arg6: memref<1x128xf32, #tpu.memory_space<vmem>>, %arg7: memref<8x128xf32, #tpu.memory_space<vmem>>) attributes {dimension_semantics = [#tpu.dimension_semantics<parallel>], iteration_bounds = array<i64: 3>, scalar_prefetch = 0 : i64, scratch_operands = 0 : i64, tpu.core_type = #tpu.core_type<tc>, window_params = [{transform_indices = @transform_0, window_bounds = array<i64: 8, 32>}, {transform_indices = @transform_1, window_bounds = array<i64: 8, 2>}, {pipeline_mode = #tpu.pipeline_mode<synchronous>, transform_indices = @transform_2, window_bounds = array<i64: 32, 128>}, {pipeline_mode = #tpu.pipeline_mode<synchronous>, transform_indices = @transform_3, window_bounds = array<i64: 3, 128>}, {pipeline_mode = #tpu.pipeline_mode<synchronous>, transform_indices = @transform_4, window_bounds = array<i64: 128, 128>}, {pipeline_mode = #tpu.pipeline_mode<synchronous>, transform_indices = @transform_5, window_bounds = array<i64: 1, 128>}, {transform_indices = @transform_6, window_bounds = array<i64: 8, 128>}]} {
    %c0 = arith.constant 0 : index
    %c0_0 = arith.constant 0 : index
    %0 = vector.load %arg1[%c0, %c0_0] : memref<8x32xf32, #tpu.memory_space<vmem>>, vector<8x32xf32>
    %c0_1 = arith.constant 0 : index
    %c0_2 = arith.constant 0 : index
    %1 = vector.load %arg2[%c0_1, %c0_2] : memref<8x2xf32, #tpu.memory_space<vmem>>, vector<8x1xf32>
    %c0_3 = arith.constant 0 : index
    %c1 = arith.constant 1 : index
    %2 = vector.load %arg2[%c0_3, %c1] : memref<8x2xf32, #tpu.memory_space<vmem>>, vector<8x1xf32>
    %3 = arith.truncf %0 : vector<8x32xf32> to vector<8x32xbf16>
    %c0_4 = arith.constant 0 : index
    %c0_5 = arith.constant 0 : index
    %4 = vector.load %arg3[%c0_4, %c0_5] : memref<32x128xbf16, #tpu.memory_space<vmem>>, vector<32x128xbf16>
    %cst = arith.constant dense<0.000000e+00> : vector<8x128xf32>
    %5 = tpu.matmul %3, %4, %cst {dimension_numbers = #tpu.dot_dimension_numbers<[1], [0], [0], [1], [0, 0, 1, 1], [], []>} : vector<8x32xbf16>, vector<32x128xbf16>, vector<8x128xf32> -> vector<8x128xf32>
    %c0_6 = arith.constant 0 : index
    %c0_7 = arith.constant 0 : index
    %6 = vector.load %arg4[%c0_6, %c0_7] : memref<3x128xf32, #tpu.memory_space<vmem>>, vector<1x128xf32>
    %7 = vector.broadcast %1 : vector<8x1xf32> to vector<8x128xf32>
    %8 = vector.broadcast %6 : vector<1x128xf32> to vector<8x128xf32>
    %9 = arith.mulf %7, %8 : vector<8x128xf32>
    %10 = arith.addf %5, %9 : vector<8x128xf32>
    %c1_8 = arith.constant 1 : index
    %c0_9 = arith.constant 0 : index
    %11 = vector.load %arg4[%c1_8, %c0_9] : memref<3x128xf32, #tpu.memory_space<vmem>>, vector<1x128xf32>
    %12 = vector.broadcast %2 : vector<8x1xf32> to vector<8x128xf32>
    %13 = vector.broadcast %11 : vector<1x128xf32> to vector<8x128xf32>
    %14 = arith.mulf %12, %13 : vector<8x128xf32>
    %15 = arith.addf %10, %14 : vector<8x128xf32>
    %c2 = arith.constant 2 : index
    %c0_10 = arith.constant 0 : index
    %16 = vector.load %arg4[%c2, %c0_10] : memref<3x128xf32, #tpu.memory_space<vmem>>, vector<1x128xf32>
    %17 = vector.broadcast %16 : vector<1x128xf32> to vector<8x128xf32>
    %18 = arith.addf %15, %17 : vector<8x128xf32>
    %cst_11 = arith.constant 0.000000e+00 : f32
    %19 = vector.broadcast %cst_11 : f32 to vector<8x128xf32>
    %20 = arith.maximumf %18, %19 : vector<8x128xf32>
    %21 = arith.truncf %20 : vector<8x128xf32> to vector<8x128xbf16>
    %c0_12 = arith.constant 0 : index
    %c0_13 = arith.constant 0 : index
    %22 = vector.load %arg5[%c0_12, %c0_13] : memref<128x128xbf16, #tpu.memory_space<vmem>>, vector<128x128xbf16>
    %cst_14 = arith.constant dense<0.000000e+00> : vector<8x128xf32>
    %23 = tpu.matmul %21, %22, %cst_14 {dimension_numbers = #tpu.dot_dimension_numbers<[1], [0], [0], [1], [0, 0, 1, 1], [], []>} : vector<8x128xbf16>, vector<128x128xbf16>, vector<8x128xf32> -> vector<8x128xf32>
    %c0_15 = arith.constant 0 : index
    %c0_16 = arith.constant 0 : index
    %24 = vector.load %arg6[%c0_15, %c0_16] : memref<1x128xf32, #tpu.memory_space<vmem>>, vector<1x128xf32>
    %25 = vector.broadcast %24 : vector<1x128xf32> to vector<8x128xf32>
    %26 = arith.addf %23, %25 : vector<8x128xf32>
    %c0_17 = arith.constant 0 : index
    %c0_18 = arith.constant 0 : index
    %27 = vector.load %arg7[%c0_17, %c0_18] : memref<8x128xf32, #tpu.memory_space<vmem>>, vector<8x128xf32>
    tpu.vector_store %arg7[%c0_17, %c0_18], %26 {strides = array<i32>} : memref<8x128xf32, #tpu.memory_space<vmem>>, vector<8x128xf32>,
    return
  }
  func.func @transform_0(%arg0: i32) -> (i32, i32) {
    %c0_i32 = arith.constant 0 : i32
    %c0_i32_0 = arith.constant 0 : i32
    return %arg0, %c0_i32 : i32, i32
  }
  func.func @transform_1(%arg0: i32) -> (i32, i32) {
    %c0_i32 = arith.constant 0 : i32
    %c0_i32_0 = arith.constant 0 : i32
    return %arg0, %c0_i32 : i32, i32
  }
  func.func @transform_2(%arg0: i32) -> (i32, i32) {
    %c0_i32 = arith.constant 0 : i32
    %c0_i32_0 = arith.constant 0 : i32
    %c0_i32_1 = arith.constant 0 : i32
    return %c0_i32, %c0_i32_0 : i32, i32
  }
  func.func @transform_3(%arg0: i32) -> (i32, i32) {
    %c0_i32 = arith.constant 0 : i32
    %c0_i32_0 = arith.constant 0 : i32
    %c0_i32_1 = arith.constant 0 : i32
    return %c0_i32, %c0_i32_0 : i32, i32
  }
  func.func @transform_4(%arg0: i32) -> (i32, i32) {
    %c0_i32 = arith.constant 0 : i32
    %c0_i32_0 = arith.constant 0 : i32
    %c0_i32_1 = arith.constant 0 : i32
    return %c0_i32, %c0_i32_0 : i32, i32
  }
  func.func @transform_5(%arg0: i32) -> (i32, i32) {
    %c0_i32 = arith.constant 0 : i32
    %c0_i32_0 = arith.constant 0 : i32
    %c0_i32_1 = arith.constant 0 : i32
    return %c0_i32, %c0_i32_0 : i32, i32
  }
  func.func @transform_6(%arg0: i32) -> (i32, i32) {
    %c0_i32 = arith.constant 0 : i32
    %c0_i32_0 = arith.constant 0 : i32
    return %arg0, %c0_i32 : i32, i32
  }
}

</mosaic_0001>

<llo_original>
// kernel: tpu_custom_call.1
$region0: #{tpu_custom_call.1}
  #allocation0 [shape = 'u32[]', space=smem, size = 0x4, offset = 0x4, fixed_abs, tag = 'smem constant byte address 0x4 - core index']
  #allocation1 [shape = 'u32[144,128]{1,0:T(1,128)}', space=vmem, size = 0x12000, scoped, tag = 'internal scratch']
  %s0 = inlined_call_operand.vmem [shape: f32[24,32], index: 0, kind: input, shape index: {}]
  %s1 = inlined_call_operand.vmem [shape: f32[24,2], index: 1, kind: input, shape index: {}]
  %s2 = inlined_call_operand.hbm [shape: bf16[32,128], index: 2, kind: input, shape index: {}]
  %s3 = inlined_call_operand.vmem [shape: f32[3,128], index: 3, kind: input, shape index: {}]
  %s4 = inlined_call_operand.hbm [shape: bf16[128,128], index: 4, kind: input, shape index: {}]
  %s5 = inlined_call_operand.vmem [shape: f32[1,128], index: 5, kind: input, shape index: {}]
  %s6 = inlined_call_operand.hbm [shape: f32[24,128], index: 6, kind: output, shape index: {}]
  %s7 = sld [smem:[#allocation0]]
  $region65: #{tpu_custom_call.1} parent=0
    _
  %s9 = ssub.s32 1, %s7
  %s10 = scalar_select 0, %s9, %s7
  $region1: #{tpu_custom_call.1} parent=0
    #allocation2 [shape = 'u8[8192]{0}', space=vmem, size = 0x2000, scoped, tag = 'input window, operand 2, single buffered']
    #allocation3 [shape = 's32[2]{0}', space=sflag, size = 0x8, scoped, tag = 'scoped memory for tpu_custom_call.1']
    #allocation4 [shape = 's32[2]{0}', space=sflag, size = 0x8, scoped, tag = 'scoped memory for tpu_custom_call.1']
    #allocation5 [shape = 'u8[32768]{0}', space=vmem, size = 0x8000, scoped, tag = 'input window, operand 4, single buffered']
    #allocation6 [shape = 's32[1]{0}', space=sflag, size = 0x4, scoped, tag = 'scoped memory for tpu_custom_call.1']
    #allocation7 [shape = 'u8[8192]{0}', space=vmem, size = 0x2000, scoped, tag = 'output window, operand 0']
    %11 = vsyncpa [#allocation3], 0
    %12 = vsyncpa [#allocation6], 0
    %13 = vsyncpa [#allocation4], 0
    %s14 = scalar_lea.sflag [#allocation4], 1
    %15 = vsyncpa %s14, 0
    loop: start=0, step=1, limit=5
    $region2: #{tpu_custom_call.1} parent=1 // loop_pre_header
      _
    $region3: #{tpu_custom_call.1} parent=1 // loop_header
      %s17 = sphi 0, %s21
      %p18 = scmp.ge.s32.totalorder %s17, 5
      %s27 = sphi 0, %s29
      %s30 = sphi 0, %s27
      %s31 = sphi 0, %s30
      %s47 = sphi 0, %s31
      %s53 = sphi 0, %s55
      %s56 = sphi 0, %s53
      %s57 = sphi 0, %s56
      %s73 = sphi 0, %s57
      %s77 = sphi 0, %s77
      %s79 = sphi 0, %s77
      %s80 = sphi 0, %s79
      %s94 = sphi 0, %s80
      %s98 = sphi 0, %s98
      %s100 = sphi 0, %s98
      %s101 = sphi 0, %s100
      %s115 = sphi 0, %s101
      %s119 = sphi 0, %s119
      %s121 = sphi 0, %s119
      %s122 = sphi 0, %s121
      %s136 = sphi 0, %s122
      %s140 = sphi 0, %s140
      %s142 = sphi 0, %s140
      %s143 = sphi 0, %s142
      %s157 = sphi 0, %s143
      %s163 = sphi 0, %s165
      %s166 = sphi 0, %s163
      %s167 = sphi 0, %s166
      %s183 = sphi 0, %s167
    $region4: #{tpu_custom_call.1} parent=1 // loop_header_branch
      %20 = sbr.rel (%p18) target = $region8
    $region5: #{tpu_custom_call.1} parent=1 // loop_body
      %s22 = ssub.s32 %s17, 1
      %s23 = ssub.s32 %s17, 2
      %s24 = sadd.s32 %s17, 1
      %s25 = ssub.s32 %s17, %s24
      %p26 = scmp.eq.s32.totalorder %s25, 0
      %s28 = sadd.s32 %s27, 1
      %s29 = scalar_select %p26, %s27, %s28
      %p32 = pneg %p26
      %p33 = scmp.eq.s32.totalorder %s17, 2
      %p34 = por %p32, %p33
      %p35 = scmp.ne.s32.totalorder %s27, %s30
      %p36 = scmp.eq.s32.totalorder %s17, 0
      %p37 = por %p35, %p36
      %p38 = scmp.ne.s32.totalorder %s27, %s30
      %p39 = scmp.eq.s32.totalorder %s22, 2
      %p40 = por %p38, %p39
      %p41 = scmp.ne.s32.totalorder %s30, %s31
      %p42 = scmp.eq.s32.totalorder %s22, 0
      %p43 = por %p41, %p42
      %p44 = scmp.ne.s32.totalorder %s30, %s31
      %p45 = scmp.eq.s32.totalorder %s23, 2
      %p46 = por %p44, %p45
      %p48 = scmp.ne.s32.totalorder %s31, %s47
      %p49 = scmp.eq.s32.totalorder %s23, 0
      %p50 = por %p48, %p49
      %s51 = ssub.s32 %s17, %s24
      %p52 = scmp.eq.s32.totalorder %s51, 0
      %s54 = sadd.s32 %s53, 1
      %s55 = scalar_select %p52, %s53, %s54
      %p58 = pneg %p52
      %p59 = scmp.eq.s32.totalorder %s17, 2
      %p60 = por %p58, %p59
      %p61 = scmp.ne.s32.totalorder %s53, %s56
      %p62 = scmp.eq.s32.totalorder %s17, 0
      %p63 = por %p61, %p62
      %p64 = scmp.ne.s32.totalorder %s53, %s56
      %p65 = scmp.eq.s32.totalorder %s22, 2
      %p66 = por %p64, %p65
      %p67 = scmp.ne.s32.totalorder %s56, %s57
      %p68 = scmp.eq.s32.totalorder %s22, 0
      %p69 = por %p67, %p68
      %p70 = scmp.ne.s32.totalorder %s56, %s57
      %p71 = scmp.eq.s32.totalorder %s23, 2
      %p72 = por %p70, %p71
      %p74 = scmp.ne.s32.totalorder %s57, %s73
      %p75 = scmp.eq.s32.totalorder %s23, 0
      %p76 = por %p74, %p75
      %s78 = sadd.s32 %s77, 1
      %p81 = scmp.eq.s32.totalorder %s17, 2
      %p82 = scmp.ne.s32.totalorder %s77, %s79
      %p83 = scmp.eq.s32.totalorder %s17, 0
      %p84 = por %p82, %p83
      %p85 = scmp.ne.s32.totalorder %s77, %s79
      %p86 = scmp.eq.s32.totalorder %s22, 2
      %p87 = por %p85, %p86
      %p88 = scmp.ne.s32.totalorder %s79, %s80
      %p89 = scmp.eq.s32.totalorder %s22, 0
      %p90 = por %p88, %p89
      %p91 = scmp.ne.s32.totalorder %s79, %s80
      %p92 = scmp.eq.s32.totalorder %s23, 2
      %p93 = por %p91, %p92
      %p95 = scmp.ne.s32.totalorder %s80, %s94
      %p96 = scmp.eq.s32.totalorder %s23, 0
      %p97 = por %p95, %p96
      %s99 = sadd.s32 %s98, 1
      %p102 = scmp.eq.s32.totalorder %s17, 2
      %p103 = scmp.ne.s32.totalorder %s98, %s100
      %p104 = scmp.eq.s32.totalorder %s17, 0
      %p105 = por %p103, %p104
      %p106 = scmp.ne.s32.totalorder %s98, %s100
      %p107 = scmp.eq.s32.totalorder %s22, 2
      %p108 = por %p106, %p107
      %p109 = scmp.ne.s32.totalorder %s100, %s101
      %p110 = scmp.eq.s32.totalorder %s22, 0
      %p111 = por %p109, %p110
      %p112 = scmp.ne.s32.totalorder %s100, %s101
      %p113 = scmp.eq.s32.totalorder %s23, 2
      %p114 = por %p112, %p113
      %p116 = scmp.ne.s32.totalorder %s101, %s115
      %p117 = scmp.eq.s32.totalorder %s23, 0
      %p118 = por %p116, %p117
      %s120 = sadd.s32 %s119, 1
      %p123 = scmp.eq.s32.totalorder %s17, 2
      %p124 = scmp.ne.s32.totalorder %s119, %s121
      %p125 = scmp.eq.s32.totalorder %s17, 0
      %p126 = por %p124, %p125
      %p127 = scmp.ne.s32.totalorder %s119, %s121
      %p128 = scmp.eq.s32.totalorder %s22, 2
      %p129 = por %p127, %p128
      %p130 = scmp.ne.s32.totalorder %s121, %s122
      %p131 = scmp.eq.s32.totalorder %s22, 0
      %p132 = por %p130, %p131
      %p133 = scmp.ne.s32.totalorder %s121, %s122
      %p134 = scmp.eq.s32.totalorder %s23, 2
      %p135 = por %p133, %p134
      %p137 = scmp.ne.s32.totalorder %s122, %s136
      %p138 = scmp.eq.s32.totalorder %s23, 0
      %p139 = por %p137, %p138
      %s141 = sadd.s32 %s140, 1
      %p144 = scmp.eq.s32.totalorder %s17, 2
      %p145 = scmp.ne.s32.totalorder %s140, %s142
      %p146 = scmp.eq.s32.totalorder %s17, 0
      %p147 = por %p145, %p146
      %p148 = scmp.ne.s32.totalorder %s140, %s142
      %p149 = scmp.eq.s32.totalorder %s22, 2
      %p150 = por %p148, %p149
      %p151 = scmp.ne.s32.totalorder %s142, %s143
      %p152 = scmp.eq.s32.totalorder %s22, 0
      %p153 = por %p151, %p152
      %p154 = scmp.ne.s32.totalorder %s142, %s143
      %p155 = scmp.eq.s32.totalorder %s23, 2
      %p156 = por %p154, %p155
      %p158 = scmp.ne.s32.totalorder %s143, %s157
      %p159 = scmp.eq.s32.totalorder %s23, 0
      %p160 = por %p158, %p159
      %s161 = ssub.s32 %s17, %s24
      %p162 = scmp.eq.s32.totalorder %s161, 0
      %s164 = sadd.s32 %s163, 1
      %s165 = scalar_select %p162, %s163, %s164
      %p168 = pneg %p162
      %p169 = scmp.eq.s32.totalorder %s17, 2
      %p170 = por %p168, %p169
      %p171 = scmp.ne.s32.totalorder %s163, %s166
      %p172 = scmp.eq.s32.totalorder %s17, 0
      %p173 = por %p171, %p172
      %p174 = scmp.ne.s32.totalorder %s163, %s166
      %p175 = scmp.eq.s32.totalorder %s22, 2
      %p176 = por %p174, %p175
      %p177 = scmp.ne.s32.totalorder %s166, %s167
      %p178 = scmp.eq.s32.totalorder %s22, 0
      %p179 = por %p177, %p178
      %p180 = scmp.ne.s32.totalorder %s166, %s167
      %p181 = scmp.eq.s32.totalorder %s23, 2
      %p182 = por %p180, %p181
      %p184 = scmp.ne.s32.totalorder %s167, %s183
      %p185 = scmp.eq.s32.totalorder %s23, 0
      %p186 = por %p184, %p185
      %p187 = scmp.le.s32.totalorder 1, %s17
      %p188 = scmp.lt.s32.totalorder %s17, 4
      %p189 = pnand %p187, %p188
      %p190 = pneg %p189
      // Predicated region
      $region9: #{tpu_custom_call.1} parent=5 // pred_check
        _
      $region10: #{tpu_custom_call.1} parent=5 // pred_check_branch
        %192 = sbr.rel (%p189) target = $region12
      $region11: #{tpu_custom_call.1} parent=5 // pred_region
        %s193 = ssub.s32 %s17, 1
        // Predicated region
        $region13: #{tpu_custom_call.1} parent=11 // pred_check
          %p194 = pneg %p90
        $region14: #{tpu_custom_call.1} parent=11 // pred_check_branch
          %196 = sbr.rel (%p194) target = $region16
        $region15: #{tpu_custom_call.1} parent=11 // pred_region
          %s198 = ssub.s32 256, 256
          %199 = vsyncadd [#allocation3], %s198
          %s200 = sshll.u32 [#allocation2], 4
          %s201 = int_to_ptr.vmem [resolvable:$true] %s200
          %206 = dma.hbm_to_vmem [thread:$0]  %s2, 256, %s201, [#allocation3], 64, 64, 4
        $region16: #{tpu_custom_call.1} parent=11 // pred_fallthru
          _
        // Predicated region
        $region17: #{tpu_custom_call.1} parent=11 // pred_check
          %p207 = pneg %p111
        $region18: #{tpu_custom_call.1} parent=11 // pred_check_branch
          %209 = sbr.rel (%p207) target = $region20
        $region19: #{tpu_custom_call.1} parent=11 // pred_region
          _
        $region20: #{tpu_custom_call.1} parent=11 // pred_fallthru
          _
        // Predicated region
        $region21: #{tpu_custom_call.1} parent=11 // pred_check
          %p210 = pneg %p132
        $region22: #{tpu_custom_call.1} parent=11 // pred_check_branch
          %212 = sbr.rel (%p210) target = $region24
        $region23: #{tpu_custom_call.1} parent=11 // pred_region
          %s214 = ssub.s32 1024, 1024
          %215 = vsyncadd [#allocation6], %s214
          %s216 = sshll.u32 [#allocation5], 4
          %s217 = int_to_ptr.vmem [resolvable:$true] %s216
          %222 = dma.hbm_to_vmem [thread:$0]  %s4, 1024, %s217, [#allocation6], 64, 64, 4
        $region24: #{tpu_custom_call.1} parent=11 // pred_fallthru
          _
        // Predicated region
        $region25: #{tpu_custom_call.1} parent=11 // pred_check
          %p223 = pneg %p153
        $region26: #{tpu_custom_call.1} parent=11 // pred_check_branch
          %225 = sbr.rel (%p223) target = $region28
        $region27: #{tpu_custom_call.1} parent=11 // pred_region
          _
        $region28: #{tpu_custom_call.1} parent=11 // pred_fallthru
          _
      $region12: #{tpu_custom_call.1} parent=5 // pred_fallthru
        _
      %p226 = scmp.lt.s32.totalorder %s17, 3
      // Predicated region
      $region29: #{tpu_custom_call.1} parent=5 // pred_check
        %p227 = pneg %p226
      $region30: #{tpu_custom_call.1} parent=5 // pred_check_branch
        %229 = sbr.rel (%p227) target = $region32
      $region31: #{tpu_custom_call.1} parent=5 // pred_region
        // Predicated region
        $region33: #{tpu_custom_call.1} parent=31 // pred_check
          %p230 = pneg %p37
        $region34: #{tpu_custom_call.1} parent=31 // pred_check_branch
          %232 = sbr.rel (%p230) target = $region36
        $region35: #{tpu_custom_call.1} parent=31 // pred_region
          %p233 = scmp.lt.s32.totalorder %s17, 2
          %s234 = scalar_select %p233, %s17, 2
          %s235 = smul.addr %s234, 8
          %s236 = scalar_lea.vmem %s0, %s235
        $region36: #{tpu_custom_call.1} parent=31 // pred_fallthru
          _
        // Predicated region
        $region37: #{tpu_custom_call.1} parent=31 // pred_check
          %p237 = pneg %p63
        $region38: #{tpu_custom_call.1} parent=31 // pred_check_branch
          %239 = sbr.rel (%p237) target = $region40
        $region39: #{tpu_custom_call.1} parent=31 // pred_region
          %p240 = scmp.lt.s32.totalorder %s17, 2
          %s241 = scalar_select %p240, %s17, 2
          %s242 = smul.addr %s241, 8
          %s243 = scalar_lea.vmem %s1, %s242
        $region40: #{tpu_custom_call.1} parent=31 // pred_fallthru
          _
      $region32: #{tpu_custom_call.1} parent=5 // pred_fallthru
        _
      %p244 = scmp.le.s32.totalorder 1, %s17
      %p245 = scmp.lt.s32.totalorder %s17, 4
      %p246 = pnand %p244, %p245
      %p247 = pneg %p246
      // Predicated region
      $region41: #{tpu_custom_call.1} parent=5 // pred_check
        _
      $region42: #{tpu_custom_call.1} parent=5 // pred_check_branch
        %249 = sbr.rel (%p246) target = $region44
      $region43: #{tpu_custom_call.1} parent=5 // pred_region
        %s250 = ssub.s32 %s17, 1
        // Predicated region
        $region45: #{tpu_custom_call.1} parent=43 // pred_check
          %p251 = pneg %p90
        $region46: #{tpu_custom_call.1} parent=43 // pred_check_branch
          %253 = sbr.rel (%p251) target = $region48
        $region47: #{tpu_custom_call.1} parent=43 // pred_region
          %254 = dma.done [#allocation3], 256
        $region48: #{tpu_custom_call.1} parent=43 // pred_fallthru
          _
        // Predicated region
        $region49: #{tpu_custom_call.1} parent=43 // pred_check
          %p255 = pneg %p132
        $region50: #{tpu_custom_call.1} parent=43 // pred_check_branch
          %257 = sbr.rel (%p255) target = $region52
        $region51: #{tpu_custom_call.1} parent=43 // pred_region
          %258 = dma.done [#allocation6], 1024
        $region52: #{tpu_custom_call.1} parent=43 // pred_fallthru
          _
        %p259 = scmp.lt.s32.totalorder %s22, 2
        %s260 = scalar_select %p259, %s22, 2
        %s261 = smul.addr %s260, 8
        %s262 = scalar_lea.vmem %s0, %s261
        %p263 = pneg %p43
        %p264 = pneg %p40
        %p265 = scmp.lt.s32.totalorder %s22, 2
        %s266 = scalar_select %p265, %s22, 2
        %s267 = smul.addr %s266, 8
        %s268 = scalar_lea.vmem %s1, %s267
        %p269 = pneg %p69
        %p270 = pneg %p66
        %p271 = pneg %p90
        %p272 = pneg %p87
        %p273 = pneg %p111
        %p274 = pneg %p108
        %p275 = pneg %p132
        %p276 = pneg %p129
        %p277 = pneg %p153
        %p278 = pneg %p150
        %p279 = pneg %p179
        %p280 = pneg %p176
        %s281 = sand.u32 %s166, 1
        %s282 = scalar_lea.sflag [#allocation4], %s281
        %s283 = sand.u32 %s166, 1
        %s284 = smul.addr %s283, 8
        %s285 = scalar_lea.vmem [#allocation7], %s284
        %p286 = scmp.lt.s32.totalorder %s22, 2
        %s287 = scalar_select %p286, %s22, 2
        %s288 = smul.addr %s287, 8
        %s289 = scalar_lea.vmem %s0, %s288
        %p290 = scmp.lt.s32.totalorder %s22, 2
        %s291 = scalar_select %p290, %s22, 2
        %s292 = smul.addr %s291, 8
        %s293 = scalar_lea.vmem %s1, %s292
        %v295 = vld [vmem:[%s289] sm:$0xff]
        %v296 = vld [vmem:[%s293] sm:$0xff]
        %v297 = vpack.c.bf16 %v295, %v295
        %v298 = vld [vmem:[#allocation2] sm:$0xf]
        %v299 = vld [vmem:[#allocation2 + $0x4] sm:$0xf]
        %v300 = vld [vmem:[#allocation2 + $0x8] sm:$0xf]
        %v301 = vld [vmem:[#allocation2 + $0xc] sm:$0xf]
        %v302 = vld [vmem:[%s3] sm:$0x1]
        %304 = vset.pattern.permute.xlu0 0
        %305 = vperm.xlu0 %304, %v296
        %v306 = vpop.permute.xlu0 %305
        %v308 = vlaneseq
        %v309 = vshrl.u32 %v308, 7
        %v310 = vsub.s32 0, %v309
        %v311 = vrot.slane %v302, %v310
        %v312 = vmul.f32 %v306, %v311
        %v317 = vunpack.c.l.b16 %v298
        %v318 = vunpack.c.l.b16 %v299
        %v319 = vunpack.c.l.b16 %v300
        %v320 = vunpack.c.l.b16 %v301
        %v321 = vpack.c.b16 %v318, %v317
        %v322 = vpack.c.b16 %v320, %v319
        %vm325 = vcmask 261120
        %v327 = vsel %vm325, %v297, 0
        %329 = vmatprep.subr.bf16.mxu0 0
        %330 = vmatpush1.bf16.msra.mxu0 0
        %331 = vmatprep.subr.bf16.mxu0 0
        %332 = vmatpush1.bf16.msra.mxu0 0
        %333 = vmatprep.subr.bf16.mxu0 0
        %334 = vmatpush1.bf16.msra.mxu0 0
        %335 = vmatprep.subr.bf16.mxu0 0
        %336 = vmatpush1.bf16.msra.mxu0 0
        %337 = vmatprep.subr.bf16.mxu0 0
        %338 = vmatpush1.bf16.msra.mxu0 0
        %339 = vmatprep.subr.bf16.mxu0 0
        %340 = vmatpush1.bf16.msra.mxu0 0
        %341 = vmatprep.subr.bf16.mxu0 0
        %342 = vmatpush1.bf16.msra.mxu0 %v322
        %343 = vmatprep.subr.bf16.mxu0 0
        %344 = vmatpush1.bf16.msra.mxu0 %v321
        %345 = vmatprep.subr.bf16.mxu0 0
        %346 = vmatpush2.bf16.msra.mxu0 0
        %347 = vmatprep.subr.bf16.mxu0 0
        %348 = vmatpush2.bf16.msra.mxu0 0
        %349 = vmatprep.subr.bf16.mxu0 0
        %350 = vmatpush2.bf16.msra.mxu0 0
        %351 = vmatprep.subr.bf16.mxu0 0
        %352 = vmatpush2.bf16.msra.mxu0 0
        %353 = vmatprep.subr.bf16.mxu0 0
        %354 = vmatpush2.bf16.msra.mxu0 0
        %355 = vmatprep.subr.bf16.mxu0 0
        %356 = vmatpush2.bf16.msra.mxu0 0
        %357 = vmatprep.subr.bf16.mxu0 0
        %358 = vmatpush2.bf16.msra.mxu0 0
        %359 = vmatprep.subr.bf16.mxu0 0
        %360 = vmatpush2.bf16.msra.mxu0 0
        %361 = vmatprep.mubr.bf16.mxu0 0
        %362 = vmatmul.mubr.bf16.gmra.mxu0 %v327
        %v363 = vpop.f32.mrf.mxu0
        %v364 = vadd.f32 %v312, %v363
        %v365 = vpop.f32.mrf.mxu0
        %v366 = vpop.f32.mrf.mxu0
        %v367 = vpop.f32.mrf.mxu0
        %368 = vdwg.mxu0
        %v369 = vld [vmem:[%s3 + $0x1] sm:$0x1]
        %370 = vset.pattern.permute.xlu0 1
        %371 = vperm.xlu0 %370, %v296
        %v372 = vpop.permute.xlu0 %371
        %v374 = vlaneseq
        %v375 = vshrl.u32 %v374, 7
        %v376 = vsub.s32 0, %v375
        %v377 = vrot.slane %v369, %v376
        %v378 = vmul.f32 %v372, %v377
        %v379 = vadd.f32 %v364, %v378
        %v380 = vld [vmem:[%s3 + $0x2] sm:$0x1]
        %v381 = vlaneseq
        %v382 = vshrl.u32 %v381, 7
        %v383 = vsub.s32 0, %v382
        %v384 = vrot.slane %v380, %v383
        %v385 = vadd.f32 %v379, %v384
        %v386 = vmax.f32 %v385, 0.0
        %v387 = vpack.c.bf16 %v386, %v386
        %v388 = vld [vmem:[#allocation5] sm:$0xf]
        %v389 = vld [vmem:[#allocation5 + $0x4] sm:$0xf]
        %v390 = vld [vmem:[#allocation5 + $0x8] sm:$0xf]
        %v391 = vld [vmem:[#allocation5 + $0xc] sm:$0xf]
        %v392 = vld [vmem:[#allocation5 + $0x10] sm:$0xf]
        %v393 = vld [vmem:[#allocation5 + $0x14] sm:$0xf]
        %v394 = vld [vmem:[#allocation5 + $0x18] sm:$0xf]
        %v395 = vld [vmem:[#allocation5 + $0x1c] sm:$0xf]
        %v396 = vld [vmem:[#allocation5 + $0x20] sm:$0xf]
        %v397 = vld [vmem:[#allocation5 + $0x24] sm:$0xf]
        %v398 = vld [vmem:[#allocation5 + $0x28] sm:$0xf]
        %v399 = vld [vmem:[#allocation5 + $0x2c] sm:$0xf]
        %v400 = vld [vmem:[#allocation5 + $0x30] sm:$0xf]
        %v401 = vld [vmem:[#allocation5 + $0x34] sm:$0xf]
        %v402 = vld [vmem:[#allocation5 + $0x38] sm:$0xf]
        %v403 = vld [vmem:[#allocation5 + $0x3c] sm:$0xf]
        %v404 = vld [vmem:[%s5] sm:$0x1]
        %v406 = vlaneseq
        %v407 = vshrl.u32 %v406, 7
        %v408 = vsub.s32 0, %v407
        %v409 = vrot.slane %v404, %v408
        %v427 = vunpack.c.l.b16 %v388
        %v428 = vunpack.c.l.b16 %v389
        %v429 = vunpack.c.l.b16 %v390
        %v430 = vunpack.c.l.b16 %v391
        %v431 = vunpack.c.l.b16 %v392
        %v432 = vunpack.c.l.b16 %v393
        %v433 = vunpack.c.l.b16 %v394
        %v434 = vunpack.c.l.b16 %v395
        %v435 = vunpack.c.l.b16 %v396
        %v436 = vunpack.c.l.b16 %v397
        %v437 = vunpack.c.l.b16 %v398
        %v438 = vunpack.c.l.b16 %v399
        %v439 = vunpack.c.l.b16 %v400
        %v440 = vunpack.c.l.b16 %v401
        %v441 = vunpack.c.l.b16 %v402
        %v442 = vunpack.c.l.b16 %v403
        %v443 = vpack.c.b16 %v428, %v427
        %v444 = vpack.c.b16 %v430, %v429
        %v445 = vpack.c.b16 %v432, %v431
        %v446 = vpack.c.b16 %v434, %v433
        %v447 = vpack.c.b16 %v436, %v435
        %v448 = vpack.c.b16 %v438, %v437
        %v449 = vpack.c.b16 %v440, %v439
        %v450 = vpack.c.b16 %v442, %v441
        %459 = vmatprep.subr.bf16.mxu0 0
        %460 = vmatpush1.bf16.msra.mxu0 %v450
        %461 = vmatprep.subr.bf16.mxu0 0
        %462 = vmatpush1.bf16.msra.mxu0 %v449
        %463 = vmatprep.subr.bf16.mxu0 0
        %464 = vmatpush1.bf16.msra.mxu0 %v448
        %465 = vmatprep.subr.bf16.mxu0 0
        %466 = vmatpush1.bf16.msra.mxu0 %v447
        %467 = vmatprep.subr.bf16.mxu0 0
        %468 = vmatpush1.bf16.msra.mxu0 %v446
        %469 = vmatprep.subr.bf16.mxu0 0
        %470 = vmatpush1.bf16.msra.mxu0 %v445
        %471 = vmatprep.subr.bf16.mxu0 0
        %472 = vmatpush1.bf16.msra.mxu0 %v444
        %473 = vmatprep.subr.bf16.mxu0 0
        %474 = vmatpush1.bf16.msra.mxu0 %v443
        %475 = vmatprep.subr.bf16.mxu0 0
        %476 = vmatpush2.bf16.msra.mxu0 0
        %477 = vmatprep.subr.bf16.mxu0 0
        %478 = vmatpush2.bf16.msra.mxu0 0
        %479 = vmatprep.subr.bf16.mxu0 0
        %480 = vmatpush2.bf16.msra.mxu0 0
        %481 = vmatprep.subr.bf16.mxu0 0
        %482 = vmatpush2.bf16.msra.mxu0 0
        %483 = vmatprep.subr.bf16.mxu0 0
        %484 = vmatpush2.bf16.msra.mxu0 0
        %485 = vmatprep.subr.bf16.mxu0 0
        %486 = vmatpush2.bf16.msra.mxu0 0
        %487 = vmatprep.subr.bf16.mxu0 0
        %488 = vmatpush2.bf16.msra.mxu0 0
        %489 = vmatprep.subr.bf16.mxu0 0
        %490 = vmatpush2.bf16.msra.mxu0 0
        %491 = vmatprep.mubr.bf16.mxu0 0
        %492 = vmatmul.mubr.bf16.gmra.mxu0 %v387
        %v493 = vpop.f32.mrf.mxu0
        %v494 = vadd.f32 %v409, %v493
        %v495 = vpop.f32.mrf.mxu0
        %v496 = vpop.f32.mrf.mxu0
        %v497 = vpop.f32.mrf.mxu0
        %498 = vdwg.mxu0
        %499 = vst [vmem:[%s285] sm:$0xff] %v494
        %s500 = sand.u32 %s166, 1
        %s501 = scalar_lea.sflag [#allocation4], %s500
        %s502 = sand.u32 %s166, 1
        %s503 = smul.addr %s502, 8
        %s504 = scalar_lea.vmem [#allocation7], %s503
        // Predicated region
        $region53: #{tpu_custom_call.1} parent=43 // pred_check
          %p505 = pneg %p176
        $region54: #{tpu_custom_call.1} parent=43 // pred_check_branch
          %507 = sbr.rel (%p505) target = $region56
        $region55: #{tpu_custom_call.1} parent=43 // pred_region
          %s509 = ssub.s32 128, 128
          %510 = vsyncadd %s501, %s509
          %s511 = smul.addr %s22, 128
          %s512 = scalar_lea.hbm %s6, %s511
          %s514 = sshll.u32 %s504, 4
          %s515 = int_to_ptr.vmem [resolvable:$true] %s514
          %517 = dma.vmem_to_hbm [thread:$0]  %s515, 128, %s512, %s501
        $region56: #{tpu_custom_call.1} parent=43 // pred_fallthru
          _
      $region44: #{tpu_custom_call.1} parent=5 // pred_fallthru
        _
      %p518 = scmp.le.s32.totalorder 2, %s17
      // Predicated region
      $region57: #{tpu_custom_call.1} parent=5 // pred_check
        %p519 = pneg %p518
      $region58: #{tpu_custom_call.1} parent=5 // pred_check_branch
        %521 = sbr.rel (%p519) target = $region60
      $region59: #{tpu_custom_call.1} parent=5 // pred_region
        %s522 = ssub.s32 %s17, 2
        // Predicated region
        $region61: #{tpu_custom_call.1} parent=59 // pred_check
          %p523 = pneg %p182
        $region62: #{tpu_custom_call.1} parent=59 // pred_check_branch
          %525 = sbr.rel (%p523) target = $region64
        $region63: #{tpu_custom_call.1} parent=59 // pred_region
          %s526 = sand.u32 %s167, 1
          %s527 = scalar_lea.sflag [#allocation4], %s526
          %s528 = sand.u32 %s167, 1
          %s529 = smul.addr %s528, 8
          %s530 = scalar_lea.vmem [#allocation7], %s529
          %531 = dma.done %s527, 128
        $region64: #{tpu_custom_call.1} parent=59 // pred_fallthru
          _
      $region60: #{tpu_custom_call.1} parent=5 // pred_fallthru
        _
    $region6: #{tpu_custom_call.1} parent=1 // loop_footer
      %s21 = sadd.s32 1, %s17
    $region7: #{tpu_custom_call.1} parent=1 // loop_footer_branch
      %16 = sbr.rel target = $region3
    $region8: #{tpu_custom_call.1} parent=1 // loop_exit
      _
    %532 = vsyncpa [#allocation3], 1
    %s533 = scalar_lea.sflag [#allocation3], 1
    %534 = vsyncpa %s533, 1
    %535 = vsyncpa [#allocation6], 1
    %536 = vsyncpa [#allocation4], 1
    %s537 = scalar_lea.sflag [#allocation4], 1
    %538 = vsyncpa %s537, 1

</llo_original>
